<compile_context>
chip_gen: v6e
topology: v6e:2x2x1
jax: 0.10.0
libtpu: 0.0.40
codegen_flags: <defaults>
</compile_context>

<pallas_src>
import jax
import jax.numpy as jnp
from jax.experimental import pallas as pl
from jax.experimental.pallas import tpu as pltpu

EMBED_DIM = 32
LN_EPS = 1e-5          # nn.LayerNorm default eps
LANES = 128            # TPU vreg lane width


def _gelu(x):
    # TODO(synk): PyTorch F.gelu defaults to the exact erf form; the tanh
    # approximation is used here for a guaranteed Mosaic lowering (~1e-3
    # divergence from erf-exact).
    return jax.nn.gelu(x, approximate=True)


def _seg_layernorm(x, g, b, avg):
    """LayerNorm over each D-wide lane segment of a (rows, P*D) packed tile.

    `avg` = kron(I_P, ones(D, D) / D): one matmul produces the per-segment
    mean broadcast back across that segment's lanes (likewise for variance).
    Reductions ride the otherwise-idle MXU; VPU math stays lane-dense.
    """
    mu = jnp.dot(x, avg, preferred_element_type=jnp.float32)
    var = jnp.dot(jnp.square(x - mu), avg, preferred_element_type=jnp.float32)
    return (x - mu) * jax.lax.rsqrt(var + LN_EPS) * g + b


# -----------------------------------------------------------------------------
# Fused MLP kernel: operates on a (tm, P*D) lane-packed row tile. All f32.
# -----------------------------------------------------------------------------
def mlp_kernel(x_ref, w1_ref, b1_ref, g1_ref, be1_ref,
               w2_ref, b2_ref, g2_ref, be2_ref, avg_ref, o_ref):
    x = x_ref[...]                        # (tm, P*D) f32, lane-dense packed rows
    avg = avg_ref[...]

    # fc1 -> GELU -> +x -> LayerNorm (no bf16 round-trips).
    h = jnp.dot(x, w1_ref[...], preferred_element_type=jnp.float32) + b1_ref[...]
    h = _gelu(h) + x
    h = _seg_layernorm(h, g1_ref[...], be1_ref[...], avg)

    # fc2 -> +h -> LayerNorm, single coalesced lane-dense slab store.
    y = jnp.dot(h, w2_ref[...], preferred_element_type=jnp.float32) + b2_ref[...] + h
    o_ref[...] = _seg_layernorm(y, g2_ref[...], be2_ref[...], avg)


# -----------------------------------------------------------------------------
# Wrapper: flatten leading dims, lane-pack, pad, one pallas_call.
# -----------------------------------------------------------------------------
def _round_up(x, m):
    return (x + m - 1) // m * m


def _choose_tile(rows, tile_cap, min_steps=4):
    """Sublane-aligned packed-row tile.

    Start from the ~2 MiB cap (amortizes the ~0.35 us/step grid overhead, gets
    DMA near HBM roofline), shrink only while the grid would have fewer than
    `min_steps` steps so the double-buffer still overlaps DMA with compute and
    v7x's second TensorCore gets work whenever the row count permits.
    """
    tm = min(tile_cap, _round_up(rows, 8))
    while tm > 8 and _round_up(rows, tm) // tm < min_steps:
        tm = max(8, _round_up(tm // 2, 8))
    return tm


def mlp_forward(x, params, *, row_tile=4096):
    """x: (..., D) float32 -> (..., D) float32; same math as the PyTorch MLP."""
    D = x.shape[-1]
    lead = x.shape[:-1]
    x2 = x.reshape(-1, D)                    # flatten batch*seq -> rows
    M = x2.shape[0]

    # Pack P consecutive rows per 128-lane vector row (P=4 at D=32) so vregs,
    # VMEM and the output store stream are lane-dense instead of 75% empty.
    P = LANES // D if (D < LANES and LANES % D == 0) else 1
    PD = P * D

    rows = -(-M // P)                        # packed rows before padding
    tm = _choose_tile(rows, row_tile)
    rows_p = _round_up(rows, tm)
    Mp = rows_p * P
    if Mp != M:
        # Zero padding: padded rows flow through LayerNorm with var=0 giving
        # finite rsqrt(eps)-scaled zeros; they are sliced off below.
        x2 = jnp.pad(x2, ((0, Mp - M), (0, 0)))
    xp = x2.reshape(rows_p, PD)              # contiguous, lane-dense repack

    f32 = jnp.float32
    eye_p = jnp.eye(P, dtype=f32)
    # Block-diagonal replication of the (D, D) weights: one (P*D, P*D) matmul
    # applies W independently to every packed segment.
    w1 = jnp.kron(eye_p, params["w1"].astype(f32))
    w2 = jnp.kron(eye_p, params["w2"].astype(f32))
    # Segmented-mean matrix for the in-kernel LayerNorm reductions.
    avg = jnp.kron(eye_p, jnp.full((D, D), 1.0 / D, f32))

    def pack_vec(v):
        return jnp.tile(v.reshape(1, D).astype(f32), (1, P))

    b1, g1, be1 = pack_vec(params["b1"]), pack_vec(params["g1"]), pack_vec(params["be1"])
    b2, g2, be2 = pack_vec(params["b2"]), pack_vec(params["g2"]), pack_vec(params["be2"])

    row_spec = pl.BlockSpec((tm, PD), lambda i: (i, 0))

    def full(a):
        # Whole (tiny) parameter array resident in VMEM; constant index_map so
        # it is DMA'd once.  (pl.Buffered(1) could drop its duplicate pipeline
        # buffer, but at <=64 KiB per parameter the saving is negligible.)
        return pl.BlockSpec(a.shape, lambda i: (0,) * a.ndim)

    out = pl.pallas_call(
        mlp_kernel,
        # f32 output to match the PyTorch module; bf16 here would halve the
        # store stream in this mem-bound kernel if downstream tolerated it.
        out_shape=jax.ShapeDtypeStruct((rows_p, PD), f32),
        grid=(rows_p // tm,),
        in_specs=[row_spec,
                  full(w1), full(b1), full(g1), full(be1),
                  full(w2), full(b2), full(g2), full(be2), full(avg)],
        out_specs=row_spec,
        compiler_params=pltpu.CompilerParams(
            dimension_semantics=("parallel",)),
    )(xp, w1, b1, g1, be1, w2, b2, g2, be2, avg)

    out = out.reshape(Mp, D)
    if Mp != M:
        out = out[:M]
    return out.reshape(*lead, D)


# -----------------------------------------------------------------------------
# Pure-JAX reference (same math, full-precision f32 matmuls).
# -----------------------------------------------------------------------------
def _layernorm_ref(x, g, b):
    mu = jnp.mean(x, axis=-1, keepdims=True)
    var = jnp.mean(jnp.square(x - mu), axis=-1, keepdims=True)
    return (x - mu) * jax.lax.rsqrt(var + LN_EPS) * g + b


def mlp_reference(x, p):
    hp = jax.lax.Precision.HIGHEST
    h = jnp.dot(x, p["w1"], precision=hp) + p["b1"]
    h = _layernorm_ref(_gelu(h) + x, p["g1"], p["be1"])
    y = jnp.dot(h, p["w2"], precision=hp) + p["b2"] + h
    return _layernorm_ref(y, p["g2"], p["be2"])


def init_params(key):
    D = EMBED_DIM
    ks = jax.random.split(key, 4)

    def w(k, shape, scale=0.02):
        return scale * jax.random.normal(k, shape, jnp.float32)

    return {
        "w1": w(ks[0], (D, D)), "b1": w(ks[1], (1, D)),
        "g1": jnp.ones((1, D), jnp.float32), "be1": jnp.zeros((1, D), jnp.float32),
        "w2": w(ks[2], (D, D)), "b2": w(ks[3], (1, D)),
        "g2": jnp.ones((1, D), jnp.float32), "be2": jnp.zeros((1, D), jnp.float32),
    }


if __name__ == "__main__":
    key = jax.random.PRNGKey(0)
    kx, kp = jax.random.split(key)
    B, S, D = 2, 8, EMBED_DIM
    x = jax.random.normal(kx, (B, S, D), jnp.float32)
    params = init_params(kp)

    out = jax.jit(mlp_forward)(x, params)
    jax.block_until_ready(out)

    ref = mlp_reference(x, params)
    assert out.shape == (B, S, D) and out.dtype == jnp.float32
    # All math is f32 now, so the kernel should match the f32 reference to
    # ~1e-5; the 1e-2 bound only leaves headroom for MXU f32 multi-pass
    # precision differences across TPU generations.
    max_err = float(jnp.max(jnp.abs(out - ref)))
    assert max_err < 1e-2, max_err
    print("KERNEL_OK")
</pallas_src>

<mosaic_0001>
module attributes {stable_mosaic.version = 11 : i64} {
  func.func @mlp_kernel(%arg0: i32, %arg1: memref<8x128xf32, #tpu.memory_space<vmem>>, %arg2: memref<128x128xf32, #tpu.memory_space<vmem>>, %arg3: memref<1x128xf32, #tpu.memory_space<vmem>>, %arg4: memref<1x128xf32, #tpu.memory_space<vmem>>, %arg5: memref<1x128xf32, #tpu.memory_space<vmem>>, %arg6: memref<128x128xf32, #tpu.memory_space<vmem>>, %arg7: memref<1x128xf32, #tpu.memory_space<vmem>>, %arg8: memref<1x128xf32, #tpu.memory_space<vmem>>, %arg9: memref<1x128xf32, #tpu.memory_space<vmem>>, %arg10: memref<128x128xf32, #tpu.memory_space<vmem>>, %arg11: memref<8x128xf32, #tpu.memory_space<vmem>>) attributes {dimension_semantics = [#tpu.dimension_semantics<parallel>], iteration_bounds = array<i64: 1>, scalar_prefetch = 0 : i64, scratch_operands = 0 : i64, tpu.core_type = #tpu.core_type<tc>, window_params = [{transform_indices = @transform_0, window_bounds = array<i64: 8, 128>}, {pipeline_mode = #tpu.pipeline_mode<synchronous>, transform_indices = @transform_1, window_bounds = array<i64: 128, 128>}, {pipeline_mode = #tpu.pipeline_mode<synchronous>, transform_indices = @transform_2, window_bounds = array<i64: 1, 128>}, {pipeline_mode = #tpu.pipeline_mode<synchronous>, transform_indices = @transform_3, window_bounds = array<i64: 1, 128>}, {pipeline_mode = #tpu.pipeline_mode<synchronous>, transform_indices = @transform_4, window_bounds = array<i64: 1, 128>}, {pipeline_mode = #tpu.pipeline_mode<synchronous>, transform_indices = @transform_5, window_bounds = array<i64: 128, 128>}, {pipeline_mode = #tpu.pipeline_mode<synchronous>, transform_indices = @transform_6, window_bounds = array<i64: 1, 128>}, {pipeline_mode = #tpu.pipeline_mode<synchronous>, transform_indices = @transform_7, window_bounds = array<i64: 1, 128>}, {pipeline_mode = #tpu.pipeline_mode<synchronous>, transform_indices = @transform_8, window_bounds = array<i64: 1, 128>}, {pipeline_mode = #tpu.pipeline_mode<synchronous>, transform_indices = @transform_9, window_bounds = array<i64: 128, 128>}, {transform_indices = @transform_10, window_bounds = array<i64: 8, 128>}]} {
    %c0 = arith.constant 0 : index
    %c0_0 = arith.constant 0 : index
    %0 = vector.load %arg1[%c0, %c0_0] : memref<8x128xf32, #tpu.memory_space<vmem>>, vector<8x128xf32>
    %c0_1 = arith.constant 0 : index
    %c0_2 = arith.constant 0 : index
    %1 = vector.load %arg10[%c0_1, %c0_2] : memref<128x128xf32, #tpu.memory_space<vmem>>, vector<128x128xf32>
    %c0_3 = arith.constant 0 : index
    %c0_4 = arith.constant 0 : index
    %2 = vector.load %arg2[%c0_3, %c0_4] : memref<128x128xf32, #tpu.memory_space<vmem>>, vector<128x128xf32>
    %cst = arith.constant dense<0.000000e+00> : vector<8x128xf32>
    %3 = tpu.matmul %0, %2, %cst {dimension_numbers = #tpu.dot_dimension_numbers<[1], [0], [0], [1], [0, 0, 1, 1], [], []>} : vector<8x128xf32>, vector<128x128xf32>, vector<8x128xf32> -> vector<8x128xf32>
    %c0_5 = arith.constant 0 : index
    %c0_6 = arith.constant 0 : index
    %4 = vector.load %arg3[%c0_5, %c0_6] : memref<1x128xf32, #tpu.memory_space<vmem>>, vector<1x128xf32>
    %5 = vector.broadcast %4 : vector<1x128xf32> to vector<8x128xf32>
    %6 = arith.addf %3, %5 : vector<8x128xf32>
    %7 = arith.mulf %6, %6 : vector<8x128xf32>
    %8 = arith.mulf %6, %7 : vector<8x128xf32>
    %cst_7 = arith.constant 4.471500e-02 : f32
    %9 = vector.broadcast %cst_7 : f32 to vector<8x128xf32>
    %10 = arith.mulf %9, %8 : vector<8x128xf32>
    %11 = arith.addf %6, %10 : vector<8x128xf32>
    %cst_8 = arith.constant 0.797884583 : f32
    %12 = vector.broadcast %cst_8 : f32 to vector<8x128xf32>
    %13 = arith.mulf %12, %11 : vector<8x128xf32>
    %14 = math.tanh %13 : vector<8x128xf32>
    %cst_9 = arith.constant 1.000000e+00 : f32
    %15 = vector.broadcast %cst_9 : f32 to vector<8x128xf32>
    %16 = arith.addf %15, %14 : vector<8x128xf32>
    %cst_10 = arith.constant 5.000000e-01 : f32
    %17 = vector.broadcast %cst_10 : f32 to vector<8x128xf32>
    %18 = arith.mulf %17, %16 : vector<8x128xf32>
    %19 = arith.mulf %6, %18 : vector<8x128xf32>
    %20 = arith.addf %19, %0 : vector<8x128xf32>
    %c0_11 = arith.constant 0 : index
    %c0_12 = arith.constant 0 : index
    %21 = vector.load %arg4[%c0_11, %c0_12] : memref<1x128xf32, #tpu.memory_space<vmem>>, vector<1x128xf32>
    %c0_13 = arith.constant 0 : index
    %c0_14 = arith.constant 0 : index
    %22 = vector.load %arg5[%c0_13, %c0_14] : memref<1x128xf32, #tpu.memory_space<vmem>>, vector<1x128xf32>
    %cst_15 = arith.constant dense<0.000000e+00> : vector<8x128xf32>
    %23 = tpu.matmul %20, %1, %cst_15 {dimension_numbers = #tpu.dot_dimension_numbers<[1], [0], [0], [1], [0, 0, 1, 1], [], []>} : vector<8x128xf32>, vector<128x128xf32>, vector<8x128xf32> -> vector<8x128xf32>
    %24 = arith.subf %20, %23 : vector<8x128xf32>
    %25 = arith.mulf %24, %24 : vector<8x128xf32>
    %cst_16 = arith.constant dense<0.000000e+00> : vector<8x128xf32>
    %26 = tpu.matmul %25, %1, %cst_16 {dimension_numbers = #tpu.dot_dimension_numbers<[1], [0], [0], [1], [0, 0, 1, 1], [], []>} : vector<8x128xf32>, vector<128x128xf32>, vector<8x128xf32> -> vector<8x128xf32>
    %27 = arith.subf %20, %23 : vector<8x128xf32>
    %cst_17 = arith.constant 9.99999974E-6 : f32
    %28 = vector.broadcast %cst_17 : f32 to vector<8x128xf32>
    %29 = arith.addf %26, %28 : vector<8x128xf32>
    %30 = math.rsqrt %29 : vector<8x128xf32>
    %31 = arith.mulf %27, %30 : vector<8x128xf32>
    %32 = vector.broadcast %21 : vector<1x128xf32> to vector<8x128xf32>
    %33 = arith.mulf %31, %32 : vector<8x128xf32>
    %34 = vector.broadcast %22 : vector<1x128xf32> to vector<8x128xf32>
    %35 = arith.addf %33, %34 : vector<8x128xf32>
    %c0_18 = arith.constant 0 : index
    %c0_19 = arith.constant 0 : index
    %36 = vector.load %arg6[%c0_18, %c0_19] : memref<128x128xf32, #tpu.memory_space<vmem>>, vector<128x128xf32>
    %cst_20 = arith.constant dense<0.000000e+00> : vector<8x128xf32>
    %37 = tpu.matmul %35, %36, %cst_20 {dimension_numbers = #tpu.dot_dimension_numbers<[1], [0], [0], [1], [0, 0, 1, 1], [], []>} : vector<8x128xf32>, vector<128x128xf32>, vector<8x128xf32> -> vector<8x128xf32>
    %c0_21 = arith.constant 0 : index
    %c0_22 = arith.constant 0 : index
    %38 = vector.load %arg7[%c0_21, %c0_22] : memref<1x128xf32, #tpu.memory_space<vmem>>, vector<1x128xf32>
    %39 = vector.broadcast %38 : vector<1x128xf32> to vector<8x128xf32>
    %40 = arith.addf %37, %39 : vector<8x128xf32>
    %41 = arith.addf %40, %35 : vector<8x128xf32>
    %c0_23 = arith.constant 0 : index
    %c0_24 = arith.constant 0 : index
    %42 = vector.load %arg8[%c0_23, %c0_24] : memref<1x128xf32, #tpu.memory_space<vmem>>, vector<1x128xf32>
    %c0_25 = arith.constant 0 : index
    %c0_26 = arith.constant 0 : index
    %43 = vector.load %arg9[%c0_25, %c0_26] : memref<1x128xf32, #tpu.memory_space<vmem>>, vector<1x128xf32>
    %cst_27 = arith.constant dense<0.000000e+00> : vector<8x128xf32>
    %44 = tpu.matmul %41, %1, %cst_27 {dimension_numbers = #tpu.dot_dimension_numbers<[1], [0], [0], [1], [0, 0, 1, 1], [], []>} : vector<8x128xf32>, vector<128x128xf32>, vector<8x128xf32> -> vector<8x128xf32>
    %45 = arith.subf %41, %44 : vector<8x128xf32>
    %46 = arith.mulf %45, %45 : vector<8x128xf32>
    %cst_28 = arith.constant dense<0.000000e+00> : vector<8x128xf32>
    %47 = tpu.matmul %46, %1, %cst_28 {dimension_numbers = #tpu.dot_dimension_numbers<[1], [0], [0], [1], [0, 0, 1, 1], [], []>} : vector<8x128xf32>, vector<128x128xf32>, vector<8x128xf32> -> vector<8x128xf32>
    %48 = arith.subf %41, %44 : vector<8x128xf32>
    %cst_29 = arith.constant 9.99999974E-6 : f32
    %49 = vector.broadcast %cst_29 : f32 to vector<8x128xf32>
    %50 = arith.addf %47, %49 : vector<8x128xf32>
    %51 = math.rsqrt %50 : vector<8x128xf32>
    %52 = arith.mulf %48, %51 : vector<8x128xf32>
    %53 = vector.broadcast %42 : vector<1x128xf32> to vector<8x128xf32>
    %54 = arith.mulf %52, %53 : vector<8x128xf32>
    %55 = vector.broadcast %43 : vector<1x128xf32> to vector<8x128xf32>
    %56 = arith.addf %54, %55 : vector<8x128xf32>
    %c0_30 = arith.constant 0 : index
    %c0_31 = arith.constant 0 : index
    %57 = vector.load %arg11[%c0_30, %c0_31] : memref<8x128xf32, #tpu.memory_space<vmem>>, vector<8x128xf32>
    tpu.vector_store %arg11[%c0_30, %c0_31], %56 {strides = array<i32>} : memref<8x128xf32, #tpu.memory_space<vmem>>, vector<8x128xf32>,
    return
  }
  func.func @transform_0(%arg0: i32) -> (i32, i32) {
    %c0_i32 = arith.constant 0 : i32
    %c0_i32_0 = arith.constant 0 : i32
    return %arg0, %c0_i32 : i32, i32
  }
  func.func @transform_1(%arg0: i32) -> (i32, i32) {
    %c0_i32 = arith.constant 0 : i32
    %c0_i32_0 = arith.constant 0 : i32
    %c0_i32_1 = arith.constant 0 : i32
    return %c0_i32, %c0_i32_0 : i32, i32
  }
  func.func @transform_2(%arg0: i32) -> (i32, i32) {
    %c0_i32 = arith.constant 0 : i32
    %c0_i32_0 = arith.constant 0 : i32
    %c0_i32_1 = arith.constant 0 : i32
    return %c0_i32, %c0_i32_0 : i32, i32
  }
  func.func @transform_3(%arg0: i32) -> (i32, i32) {
    %c0_i32 = arith.constant 0 : i32
    %c0_i32_0 = arith.constant 0 : i32
    %c0_i32_1 = arith.constant 0 : i32
    return %c0_i32, %c0_i32_0 : i32, i32
  }
  func.func @transform_4(%arg0: i32) -> (i32, i32) {
    %c0_i32 = arith.constant 0 : i32
    %c0_i32_0 = arith.constant 0 : i32
    %c0_i32_1 = arith.constant 0 : i32
    return %c0_i32, %c0_i32_0 : i32, i32
  }
  func.func @transform_5(%arg0: i32) -> (i32, i32) {
    %c0_i32 = arith.constant 0 : i32
    %c0_i32_0 = arith.constant 0 : i32
    %c0_i32_1 = arith.constant 0 : i32
    return %c0_i32, %c0_i32_0 : i32, i32
  }
  func.func @transform_6(%arg0: i32) -> (i32, i32) {
    %c0_i32 = arith.constant 0 : i32
    %c0_i32_0 = arith.constant 0 : i32
    %c0_i32_1 = arith.constant 0 : i32
    return %c0_i32, %c0_i32_0 : i32, i32
  }
  func.func @transform_7(%arg0: i32) -> (i32, i32) {
    %c0_i32 = arith.constant 0 : i32
    %c0_i32_0 = arith.constant 0 : i32
    %c0_i32_1 = arith.constant 0 : i32
    return %c0_i32, %c0_i32_0 : i32, i32
  }
  func.func @transform_8(%arg0: i32) -> (i32, i32) {
    %c0_i32 = arith.constant 0 : i32
    %c0_i32_0 = arith.constant 0 : i32
    %c0_i32_1 = arith.constant 0 : i32
    return %c0_i32, %c0_i32_0 : i32, i32
  }
  func.func @transform_9(%arg0: i32) -> (i32, i32) {
    %c0_i32 = arith.constant 0 : i32
    %c0_i32_0 = arith.constant 0 : i32
    %c0_i32_1 = arith.constant 0 : i32
    return %c0_i32, %c0_i32_0 : i32, i32
  }
  func.func @transform_10(%arg0: i32) -> (i32, i32) {
    %c0_i32 = arith.constant 0 : i32
    %c0_i32_0 = arith.constant 0 : i32
    return %arg0, %c0_i32 : i32, i32
  }
}

</mosaic_0001>

<llo_original>
// kernel: mlp_forward.1
$region0: #{mlp_forward.1}
  #allocation0 [shape = 'u32[]', space=smem, size = 0x4, offset = 0x4, fixed_abs, tag = 'smem constant byte address 0x4 - core index']
  #allocation1 [shape = 'u32[144,128]{1,0:T(1,128)}', space=vmem, size = 0x12000, scoped, tag = 'internal scratch']
  %s0 = inlined_call_operand.vmem [shape: f32[8,128], index: 0, kind: input, shape index: {}]
  %s1 = inlined_call_operand.vmem [shape: f32[128,128], index: 1, kind: input, shape index: {}]
  %s2 = inlined_call_operand.vmem [shape: f32[1,128], index: 2, kind: input, shape index: {}]
  %s3 = inlined_call_operand.vmem [shape: f32[1,128], index: 3, kind: input, shape index: {}]
  %s4 = inlined_call_operand.vmem [shape: f32[1,128], index: 4, kind: input, shape index: {}]
  %s5 = inlined_call_operand.vmem [shape: f32[128,128], index: 5, kind: input, shape index: {}]
  %s6 = inlined_call_operand.vmem [shape: f32[1,128], index: 6, kind: input, shape index: {}]
  %s7 = inlined_call_operand.vmem [shape: f32[1,128], index: 7, kind: input, shape index: {}]
  %s8 = inlined_call_operand.vmem [shape: f32[1,128], index: 8, kind: input, shape index: {}]
  %s9 = inlined_call_operand.vmem [shape: f32[128,128], index: 9, kind: input, shape index: {}]
  %s10 = inlined_call_operand.vmem [shape: f32[8,128], index: 10, kind: output, shape index: {}]
  %s11 = sld [smem:[#allocation0]]
  $region50: #{mlp_forward.1} parent=0
    _
  %s13 = ssub.s32 1, %s11
  %s14 = scalar_select 0, %s13, %s11
  // Predicated region
  $region2: #{mlp_forward.1} parent=0 // pred_check
    _
  $region3: #{mlp_forward.1} parent=0 // pred_check_branch
    %16 = sbr.rel (0) target = $region5
  $region4: #{mlp_forward.1} parent=0 // pred_region
    _
  $region5: #{mlp_forward.1} parent=0 // pred_fallthru
    _
  // Predicated region
  $region6: #{mlp_forward.1} parent=0 // pred_check
    _
  $region7: #{mlp_forward.1} parent=0 // pred_check_branch
    %18 = sbr.rel (0) target = $region9
  $region8: #{mlp_forward.1} parent=0 // pred_region
    _
  $region9: #{mlp_forward.1} parent=0 // pred_fallthru
    _
  // Predicated region
  $region10: #{mlp_forward.1} parent=0 // pred_check
    _
  $region11: #{mlp_forward.1} parent=0 // pred_check_branch
    %20 = sbr.rel (0) target = $region13
  $region12: #{mlp_forward.1} parent=0 // pred_region
    _
  $region13: #{mlp_forward.1} parent=0 // pred_fallthru
    _
  // Predicated region
  $region14: #{mlp_forward.1} parent=0 // pred_check
    _
  $region15: #{mlp_forward.1} parent=0 // pred_check_branch
    %22 = sbr.rel (0) target = $region17
  $region16: #{mlp_forward.1} parent=0 // pred_region
    _
  $region17: #{mlp_forward.1} parent=0 // pred_fallthru
    _
  // Predicated region
  $region18: #{mlp_forward.1} parent=0 // pred_check
    _
  $region19: #{mlp_forward.1} parent=0 // pred_check_branch
    %24 = sbr.rel (0) target = $region21
  $region20: #{mlp_forward.1} parent=0 // pred_region
    _
  $region21: #{mlp_forward.1} parent=0 // pred_fallthru
    _
  // Predicated region
  $region22: #{mlp_forward.1} parent=0 // pred_check
    _
  $region23: #{mlp_forward.1} parent=0 // pred_check_branch
    %26 = sbr.rel (0) target = $region25
  $region24: #{mlp_forward.1} parent=0 // pred_region
    _
  $region25: #{mlp_forward.1} parent=0 // pred_fallthru
    _
  // Predicated region
  $region26: #{mlp_forward.1} parent=0 // pred_check
    _
  $region27: #{mlp_forward.1} parent=0 // pred_check_branch
    %28 = sbr.rel (0) target = $region29
  $region28: #{mlp_forward.1} parent=0 // pred_region
    _
  $region29: #{mlp_forward.1} parent=0 // pred_fallthru
    _
  // Predicated region
  $region30: #{mlp_forward.1} parent=0 // pred_check
    _
  $region31: #{mlp_forward.1} parent=0 // pred_check_branch
    %30 = sbr.rel (0) target = $region33
  $region32: #{mlp_forward.1} parent=0 // pred_region
    _
  $region33: #{mlp_forward.1} parent=0 // pred_fallthru
    _
  // Predicated region
  $region34: #{mlp_forward.1} parent=0 // pred_check
    _
  $region35: #{mlp_forward.1} parent=0 // pred_check_branch
    %32 = sbr.rel (0) target = $region37
  $region36: #{mlp_forward.1} parent=0 // pred_region
    _
  $region37: #{mlp_forward.1} parent=0 // pred_fallthru
    _
  // Predicated region
  $region38: #{mlp_forward.1} parent=0 // pred_check
    _
  $region39: #{mlp_forward.1} parent=0 // pred_check_branch
    %34 = sbr.rel (0) target = $region41
  $region40: #{mlp_forward.1} parent=0 // pred_region
    _
  $region41: #{mlp_forward.1} parent=0 // pred_fallthru
    _
  %v35 = vld [vmem:[%s0] sm:$0xff]
  %v36 = vld [vmem:[%s9] sm:$0xff]
  %v37 = vld [vmem:[%s9 + $0x8] sm:$0xff]
  %v38 = vld [vmem:[%s9 + $0x10] sm:$0xff]
  %v39 = vld [vmem:[%s9 + $0x18] sm:$0xff]
  %v40 = vld [vmem:[%s9 + $0x20] sm:$0xff]
  %v41 = vld [vmem:[%s9 + $0x28] sm:$0xff]
  %v42 = vld [vmem:[%s9 + $0x30] sm:$0xff]
  %v43 = vld [vmem:[%s9 + $0x38] sm:$0xff]
  %v44 = vld [vmem:[%s9 + $0x40] sm:$0xff]
  %v45 = vld [vmem:[%s9 + $0x48] sm:$0xff]
  %v46 = vld [vmem:[%s9 + $0x50] sm:$0xff]
  %v47 = vld [vmem:[%s9 + $0x58] sm:$0xff]
  %v48 = vld [vmem:[%s9 + $0x60] sm:$0xff]
  %v49 = vld [vmem:[%s9 + $0x68] sm:$0xff]
  %v50 = vld [vmem:[%s9 + $0x70] sm:$0xff]
  %v51 = vld [vmem:[%s9 + $0x78] sm:$0xff]
  %v52 = vld [vmem:[%s1] sm:$0xff]
  %v53 = vld [vmem:[%s1 + $0x8] sm:$0xff]
  %v54 = vld [vmem:[%s1 + $0x10] sm:$0xff]
  %v55 = vld [vmem:[%s1 + $0x18] sm:$0xff]
  %v56 = vld [vmem:[%s1 + $0x20] sm:$0xff]
  %v57 = vld [vmem:[%s1 + $0x28] sm:$0xff]
  %v58 = vld [vmem:[%s1 + $0x30] sm:$0xff]
  %v59 = vld [vmem:[%s1 + $0x38] sm:$0xff]
  %v60 = vld [vmem:[%s1 + $0x40] sm:$0xff]
  %v61 = vld [vmem:[%s1 + $0x48] sm:$0xff]
  %v62 = vld [vmem:[%s1 + $0x50] sm:$0xff]
  %v63 = vld [vmem:[%s1 + $0x58] sm:$0xff]
  %v64 = vld [vmem:[%s1 + $0x60] sm:$0xff]
  %v65 = vld [vmem:[%s1 + $0x68] sm:$0xff]
  %v66 = vld [vmem:[%s1 + $0x70] sm:$0xff]
  %v67 = vld [vmem:[%s1 + $0x78] sm:$0xff]
  %v68 = vld [vmem:[%s2] sm:$0x1]
  %v70 = vlaneseq
  %v71 = vshrl.u32 %v70, 7
  %v72 = vsub.s32 0, %v71
  %v73 = vrot.slane %v68, %v72
  %75 = vmatprep.subr.mxu0 0.0
  %76 = vmatpush1.msra.mxu0 %v67
  %77 = vmatprep.subr.mxu0 0.0
  %78 = vmatpush1.msra.mxu0 %v66
  %79 = vmatprep.subr.mxu0 0.0
  %80 = vmatpush1.msra.mxu0 %v65
  %81 = vmatprep.subr.mxu0 0.0
  %82 = vmatpush1.msra.mxu0 %v64
  %83 = vmatprep.subr.mxu0 0.0
  %84 = vmatpush1.msra.mxu0 %v63
  %85 = vmatprep.subr.mxu0 0.0
  %86 = vmatpush1.msra.mxu0 %v62
  %87 = vmatprep.subr.mxu0 0.0
  %88 = vmatpush1.msra.mxu0 %v61
  %89 = vmatprep.subr.mxu0 0.0
  %90 = vmatpush1.msra.mxu0 %v60
  %91 = vmatprep.subr.mxu0 0.0
  %92 = vmatpush1.msra.mxu0 %v59
  %93 = vmatprep.subr.mxu0 0.0
  %94 = vmatpush1.msra.mxu0 %v58
  %95 = vmatprep.subr.mxu0 0.0
  %96 = vmatpush1.msra.mxu0 %v57
  %97 = vmatprep.subr.mxu0 0.0
  %98 = vmatpush1.msra.mxu0 %v56
  %99 = vmatprep.subr.mxu0 0.0
  %100 = vmatpush1.msra.mxu0 %v55
  %101 = vmatprep.subr.mxu0 0.0
  %102 = vmatpush1.msra.mxu0 %v54
  %103 = vmatprep.subr.mxu0 0.0
  %104 = vmatpush1.msra.mxu0 %v53
  %105 = vmatprep.subr.mxu0 0.0
  %106 = vmatpush1.msra.mxu0 %v52
  %107 = vmatprep.subr.mxu0 0.0
  %108 = vmatpush2.msra.mxu0 0.0
  %109 = vmatprep.subr.mxu0 0.0
  %110 = vmatpush2.msra.mxu0 0.0
  %111 = vmatprep.subr.mxu0 0.0
  %112 = vmatpush2.msra.mxu0 0.0
  %113 = vmatprep.subr.mxu0 0.0
  %114 = vmatpush2.msra.mxu0 0.0
  %115 = vmatprep.subr.mxu0 0.0
  %116 = vmatpush2.msra.mxu0 0.0
  %117 = vmatprep.subr.mxu0 0.0
  %118 = vmatpush2.msra.mxu0 0.0
  %119 = vmatprep.subr.mxu0 0.0
  %120 = vmatpush2.msra.mxu0 0.0
  %121 = vmatprep.subr.mxu0 0.0
  %122 = vmatpush2.msra.mxu0 0.0
  %123 = vmatprep.subr.mxu0 0.0
  %124 = vmatpush2.msra.mxu0 0.0
  %125 = vmatprep.subr.mxu0 0.0
  %126 = vmatpush2.msra.mxu0 0.0
  %127 = vmatprep.subr.mxu0 0.0
  %128 = vmatpush2.msra.mxu0 0.0
  %129 = vmatprep.subr.mxu0 0.0
  %130 = vmatpush2.msra.mxu0 0.0
  %131 = vmatprep.subr.mxu0 0.0
  %132 = vmatpush2.msra.mxu0 0.0
  %133 = vmatprep.subr.mxu0 0.0
  %134 = vmatpush2.msra.mxu0 0.0
  %135 = vmatprep.subr.mxu0 0.0
  %136 = vmatpush2.msra.mxu0 0.0
  %137 = vmatprep.subr.mxu0 0.0
  %138 = vmatpush2.msra.mxu0 0.0
  %139 = vmatprep.mubr.f32.mxu0 0.0
  %140 = vmatmul.mubr.f32.gmra.mxu0 %v35
  %v141 = vpop.f32.mrf.mxu0
  %v142 = vadd.f32 %v73, %v141
  %v143 = vpop.f32.mrf.mxu0
  %144 = vdwg.mxu0
  %v145 = vmul.f32 %v142, %v142
  %v146 = vmul.f32 %v142, %v145
  %v147 = vmul.f32 %v146, 0.044715
  %v148 = vadd.f32 %v142, %v147
  %v149 = vmul.f32 %v148, 0.7978846
  %v150 = vtanh.pop %v149
  %v151 = vadd.f32 %v150, 1.0
  %v152 = vmul.f32 %v151, 0.5
  %v153 = vmul.f32 %v142, %v152
  %v154 = vadd.f32 %v153, %v35
  %v155 = vld [vmem:[%s3] sm:$0x1]
  %v156 = vld [vmem:[%s4] sm:$0x1]
  %157 = vmatprep.subr.mxu0 0.0
  %158 = vmatpush1.msra.mxu0 %v51
  %159 = vmatprep.subr.mxu0 0.0
  %160 = vmatpush1.msra.mxu0 %v50
  %161 = vmatprep.subr.mxu0 0.0
  %162 = vmatpush1.msra.mxu0 %v49
  %163 = vmatprep.subr.mxu0 0.0
  %164 = vmatpush1.msra.mxu0 %v48
  %165 = vmatprep.subr.mxu0 0.0
  %166 = vmatpush1.msra.mxu0 %v47
  %167 = vmatprep.subr.mxu0 0.0
  %168 = vmatpush1.msra.mxu0 %v46
  %169 = vmatprep.subr.mxu0 0.0
  %170 = vmatpush1.msra.mxu0 %v45
  %171 = vmatprep.subr.mxu0 0.0
  %172 = vmatpush1.msra.mxu0 %v44
  %173 = vmatprep.subr.mxu0 0.0
  %174 = vmatpush1.msra.mxu0 %v43
  %175 = vmatprep.subr.mxu0 0.0
  %176 = vmatpush1.msra.mxu0 %v42
  %177 = vmatprep.subr.mxu0 0.0
  %178 = vmatpush1.msra.mxu0 %v41
  %179 = vmatprep.subr.mxu0 0.0
  %180 = vmatpush1.msra.mxu0 %v40
  %181 = vmatprep.subr.mxu0 0.0
  %182 = vmatpush1.msra.mxu0 %v39
  %183 = vmatprep.subr.mxu0 0.0
  %184 = vmatpush1.msra.mxu0 %v38
  %185 = vmatprep.subr.mxu0 0.0
  %186 = vmatpush1.msra.mxu0 %v37
  %187 = vmatprep.subr.mxu0 0.0
  %188 = vmatpush1.msra.mxu0 %v36
  %189 = vmatprep.subr.mxu0 0.0
  %190 = vmatpush2.msra.mxu0 0.0
  %191 = vmatprep.subr.mxu0 0.0
  %192 = vmatpush2.msra.mxu0 0.0
  %193 = vmatprep.subr.mxu0 0.0
  %194 = vmatpush2.msra.mxu0 0.0
  %195 = vmatprep.subr.mxu0 0.0
  %196 = vmatpush2.msra.mxu0 0.0
  %197 = vmatprep.subr.mxu0 0.0
  %198 = vmatpush2.msra.mxu0 0.0
  %199 = vmatprep.subr.mxu0 0.0
  %200 = vmatpush2.msra.mxu0 0.0
  %201 = vmatprep.subr.mxu0 0.0
  %202 = vmatpush2.msra.mxu0 0.0
  %203 = vmatprep.subr.mxu0 0.0
  %204 = vmatpush2.msra.mxu0 0.0
  %205 = vmatprep.subr.mxu0 0.0
  %206 = vmatpush2.msra.mxu0 0.0
  %207 = vmatprep.subr.mxu0 0.0
  %208 = vmatpush2.msra.mxu0 0.0
  %209 = vmatprep.subr.mxu0 0.0
  %210 = vmatpush2.msra.mxu0 0.0
  %211 = vmatprep.subr.mxu0 0.0
  %212 = vmatpush2.msra.mxu0 0.0
  %213 = vmatprep.subr.mxu0 0.0
  %214 = vmatpush2.msra.mxu0 0.0
  %215 = vmatprep.subr.mxu0 0.0
  %216 = vmatpush2.msra.mxu0 0.0
  %217 = vmatprep.subr.mxu0 0.0
  %218 = vmatpush2.msra.mxu0 0.0
  %219 = vmatprep.subr.mxu0 0.0
  %220 = vmatpush2.msra.mxu0 0.0
  %221 = vmatprep.mubr.f32.mxu0 0.0
  %222 = vmatmul.mubr.f32.gmra.mxu0 %v154
  %v223 = vpop.f32.mrf.mxu0
  %v224 = vadd.f32 0.0, %v223
  %v225 = vpop.f32.mrf.mxu0
  %226 = vdwg.mxu0
  %v227 = vsub.f32 %v154, %v224
  %v228 = vmul.f32 %v227, %v227
  %229 = vmatprep.subr.mxu0 0.0
  %230 = vmatpush1.msra.mxu0 %v51
  %231 = vmatprep.subr.mxu0 0.0
  %232 = vmatpush1.msra.mxu0 %v50
  %233 = vmatprep.subr.mxu0 0.0
  %234 = vmatpush1.msra.mxu0 %v49
  %235 = vmatprep.subr.mxu0 0.0
  %236 = vmatpush1.msra.mxu0 %v48
  %237 = vmatprep.subr.mxu0 0.0
  %238 = vmatpush1.msra.mxu0 %v47
  %239 = vmatprep.subr.mxu0 0.0
  %240 = vmatpush1.msra.mxu0 %v46
  %241 = vmatprep.subr.mxu0 0.0
  %242 = vmatpush1.msra.mxu0 %v45
  %243 = vmatprep.subr.mxu0 0.0
  %244 = vmatpush1.msra.mxu0 %v44
  %245 = vmatprep.subr.mxu0 0.0
  %246 = vmatpush1.msra.mxu0 %v43
  %247 = vmatprep.subr.mxu0 0.0
  %248 = vmatpush1.msra.mxu0 %v42
  %249 = vmatprep.subr.mxu0 0.0
  %250 = vmatpush1.msra.mxu0 %v41
  %251 = vmatprep.subr.mxu0 0.0
  %252 = vmatpush1.msra.mxu0 %v40
  %253 = vmatprep.subr.mxu0 0.0
  %254 = vmatpush1.msra.mxu0 %v39
  %255 = vmatprep.subr.mxu0 0.0
  %256 = vmatpush1.msra.mxu0 %v38
  %257 = vmatprep.subr.mxu0 0.0
  %258 = vmatpush1.msra.mxu0 %v37
  %259 = vmatprep.subr.mxu0 0.0
  %260 = vmatpush1.msra.mxu0 %v36
  %261 = vmatprep.subr.mxu0 0.0
  %262 = vmatpush2.msra.mxu0 0.0
  %263 = vmatprep.subr.mxu0 0.0
  %264 = vmatpush2.msra.mxu0 0.0
  %265 = vmatprep.subr.mxu0 0.0
  %266 = vmatpush2.msra.mxu0 0.0
  %267 = vmatprep.subr.mxu0 0.0
  %268 = vmatpush2.msra.mxu0 0.0
  %269 = vmatprep.subr.mxu0 0.0
  %270 = vmatpush2.msra.mxu0 0.0
  %271 = vmatprep.subr.mxu0 0.0
  %272 = vmatpush2.msra.mxu0 0.0
  %273 = vmatprep.subr.mxu0 0.0
  %274 = vmatpush2.msra.mxu0 0.0
  %275 = vmatprep.subr.mxu0 0.0
  %276 = vmatpush2.msra.mxu0 0.0
  %277 = vmatprep.subr.mxu0 0.0
  %278 = vmatpush2.msra.mxu0 0.0
  %279 = vmatprep.subr.mxu0 0.0
  %280 = vmatpush2.msra.mxu0 0.0
  %281 = vmatprep.subr.mxu0 0.0
  %282 = vmatpush2.msra.mxu0 0.0
  %283 = vmatprep.subr.mxu0 0.0
  %284 = vmatpush2.msra.mxu0 0.0
  %285 = vmatprep.subr.mxu0 0.0
  %286 = vmatpush2.msra.mxu0 0.0
  %287 = vmatprep.subr.mxu0 0.0
  %288 = vmatpush2.msra.mxu0 0.0
  %289 = vmatprep.subr.mxu0 0.0
  %290 = vmatpush2.msra.mxu0 0.0
  %291 = vmatprep.subr.mxu0 0.0
  %292 = vmatpush2.msra.mxu0 0.0
  %293 = vmatprep.mubr.f32.mxu0 0.0
  %294 = vmatmul.mubr.f32.gmra.mxu0 %v228
  %v295 = vpop.f32.mrf.mxu0
  %v296 = vadd.f32 1e-05, %v295
  %v297 = vpop.f32.mrf.mxu0
  %298 = vdwg.mxu0
  %v299 = vrsqrt.pop %v296
  %v300 = vmul.f32 %v227, %v299
  %v302 = vlaneseq
  %v303 = vshrl.u32 %v302, 7
  %v304 = vsub.s32 0, %v303
  %v305 = vrot.slane %v155, %v304
  %v307 = vmul.f32 %v300, %v305
  %v309 = vlaneseq
  %v310 = vshrl.u32 %v309, 7
  %v311 = vsub.s32 0, %v310
  %v312 = vrot.slane %v156, %v311
  %v314 = vadd.f32 %v307, %v312
  %v315 = vld [vmem:[%s5] sm:$0xff]
  %v316 = vld [vmem:[%s5 + $0x8] sm:$0xff]
  %v317 = vld [vmem:[%s5 + $0x10] sm:$0xff]
  %v318 = vld [vmem:[%s5 + $0x18] sm:$0xff]
  %v319 = vld [vmem:[%s5 + $0x20] sm:$0xff]
  %v320 = vld [vmem:[%s5 + $0x28] sm:$0xff]
  %v321 = vld [vmem:[%s5 + $0x30] sm:$0xff]
  %v322 = vld [vmem:[%s5 + $0x38] sm:$0xff]
  %v323 = vld [vmem:[%s5 + $0x40] sm:$0xff]
  %v324 = vld [vmem:[%s5 + $0x48] sm:$0xff]
  %v325 = vld [vmem:[%s5 + $0x50] sm:$0xff]
  %v326 = vld [vmem:[%s5 + $0x58] sm:$0xff]
  %v327 = vld [vmem:[%s5 + $0x60] sm:$0xff]
  %v328 = vld [vmem:[%s5 + $0x68] sm:$0xff]
  %v329 = vld [vmem:[%s5 + $0x70] sm:$0xff]
  %v330 = vld [vmem:[%s5 + $0x78] sm:$0xff]
  %v331 = vld [vmem:[%s6] sm:$0x1]
  %v333 = vlaneseq
  %v334 = vshrl.u32 %v333, 7
  %v335 = vsub.s32 0, %v334
  %v336 = vrot.slane %v331, %v335
  %338 = vmatprep.subr.mxu0 0.0
  %339 = vmatpush1.msra.mxu0 %v330
  %340 = vmatprep.subr.mxu0 0.0
  %341 = vmatpush1.msra.mxu0 %v329
  %342 = vmatprep.subr.mxu0 0.0
  %343 = vmatpush1.msra.mxu0 %v328
  %344 = vmatprep.subr.mxu0 0.0
  %345 = vmatpush1.msra.mxu0 %v327
  %346 = vmatprep.subr.mxu0 0.0
  %347 = vmatpush1.msra.mxu0 %v326
  %348 = vmatprep.subr.mxu0 0.0
  %349 = vmatpush1.msra.mxu0 %v325
  %350 = vmatprep.subr.mxu0 0.0
  %351 = vmatpush1.msra.mxu0 %v324
  %352 = vmatprep.subr.mxu0 0.0
  %353 = vmatpush1.msra.mxu0 %v323
  %354 = vmatprep.subr.mxu0 0.0
  %355 = vmatpush1.msra.mxu0 %v322
  %356 = vmatprep.subr.mxu0 0.0
  %357 = vmatpush1.msra.mxu0 %v321
  %358 = vmatprep.subr.mxu0 0.0
  %359 = vmatpush1.msra.mxu0 %v320
  %360 = vmatprep.subr.mxu0 0.0
  %361 = vmatpush1.msra.mxu0 %v319
  %362 = vmatprep.subr.mxu0 0.0
  %363 = vmatpush1.msra.mxu0 %v318
  %364 = vmatprep.subr.mxu0 0.0
  %365 = vmatpush1.msra.mxu0 %v317
  %366 = vmatprep.subr.mxu0 0.0
  %367 = vmatpush1.msra.mxu0 %v316
  %368 = vmatprep.subr.mxu0 0.0
  %369 = vmatpush1.msra.mxu0 %v315
  %370 = vmatprep.subr.mxu0 0.0
  %371 = vmatpush2.msra.mxu0 0.0
  %372 = vmatprep.subr.mxu0 0.0
  %373 = vmatpush2.msra.mxu0 0.0
  %374 = vmatprep.subr.mxu0 0.0
  %375 = vmatpush2.msra.mxu0 0.0
  %376 = vmatprep.subr.mxu0 0.0
  %377 = vmatpush2.msra.mxu0 0.0
  %378 = vmatprep.subr.mxu0 0.0
  %379 = vmatpush2.msra.mxu0 0.0
  %380 = vmatprep.subr.mxu0 0.0
  %381 = vmatpush2.msra.mxu0 0.0
  %382 = vmatprep.subr.mxu0 0.0
  %383 = vmatpush2.msra.mxu0 0.0
  %384 = vmatprep.subr.mxu0 0.0
  %385 = vmatpush2.msra.mxu0 0.0
  %386 = vmatprep.subr.mxu0 0.0
  %387 = vmatpush2.msra.mxu0 0.0
  %388 = vmatprep.subr.mxu0 0.0
  %389 = vmatpush2.msra.mxu0 0.0
  %390 = vmatprep.subr.mxu0 0.0
  %391 = vmatpush2.msra.mxu0 0.0
  %392 = vmatprep.subr.mxu0 0.0
  %393 = vmatpush2.msra.mxu0 0.0
  %394 = vmatprep.subr.mxu0 0.0
  %395 = vmatpush2.msra.mxu0 0.0
  %396 = vmatprep.subr.mxu0 0.0
  %397 = vmatpush2.msra.mxu0 0.0
  %398 = vmatprep.subr.mxu0 0.0
  %399 = vmatpush2.msra.mxu0 0.0
  %400 = vmatprep.subr.mxu0 0.0
  %401 = vmatpush2.msra.mxu0 0.0
  %402 = vmatprep.mubr.f32.mxu0 0.0
  %403 = vmatmul.mubr.f32.gmra.mxu0 %v314
  %v404 = vpop.f32.mrf.mxu0
  %v405 = vadd.f32 %v336, %v404
  %v406 = vpop.f32.mrf.mxu0
  %407 = vdwg.mxu0
  %v408 = vadd.f32 %v405, %v314
  %v409 = vld [vmem:[%s7] sm:$0x1]
  %v410 = vld [vmem:[%s8] sm:$0x1]
  %411 = vmatprep.subr.mxu0 0.0
  %412 = vmatpush1.msra.mxu0 %v51
  %413 = vmatprep.subr.mxu0 0.0
  %414 = vmatpush1.msra.mxu0 %v50
  %415 = vmatprep.subr.mxu0 0.0
  %416 = vmatpush1.msra.mxu0 %v49
  %417 = vmatprep.subr.mxu0 0.0
  %418 = vmatpush1.msra.mxu0 %v48
  %419 = vmatprep.subr.mxu0 0.0
  %420 = vmatpush1.msra.mxu0 %v47
  %421 = vmatprep.subr.mxu0 0.0
  %422 = vmatpush1.msra.mxu0 %v46
  %423 = vmatprep.subr.mxu0 0.0
  %424 = vmatpush1.msra.mxu0 %v45
  %425 = vmatprep.subr.mxu0 0.0
  %426 = vmatpush1.msra.mxu0 %v44
  %427 = vmatprep.subr.mxu0 0.0
  %428 = vmatpush1.msra.mxu0 %v43
  %429 = vmatprep.subr.mxu0 0.0
  %430 = vmatpush1.msra.mxu0 %v42
  %431 = vmatprep.subr.mxu0 0.0
  %432 = vmatpush1.msra.mxu0 %v41
  %433 = vmatprep.subr.mxu0 0.0
  %434 = vmatpush1.msra.mxu0 %v40
  %435 = vmatprep.subr.mxu0 0.0
  %436 = vmatpush1.msra.mxu0 %v39
  %437 = vmatprep.subr.mxu0 0.0
  %438 = vmatpush1.msra.mxu0 %v38
  %439 = vmatprep.subr.mxu0 0.0
  %440 = vmatpush1.msra.mxu0 %v37
  %441 = vmatprep.subr.mxu0 0.0
  %442 = vmatpush1.msra.mxu0 %v36
  %443 = vmatprep.subr.mxu0 0.0
  %444 = vmatpush2.msra.mxu0 0.0
  %445 = vmatprep.subr.mxu0 0.0
  %446 = vmatpush2.msra.mxu0 0.0
  %447 = vmatprep.subr.mxu0 0.0
  %448 = vmatpush2.msra.mxu0 0.0
  %449 = vmatprep.subr.mxu0 0.0
  %450 = vmatpush2.msra.mxu0 0.0
  %451 = vmatprep.subr.mxu0 0.0
  %452 = vmatpush2.msra.mxu0 0.0
  %453 = vmatprep.subr.mxu0 0.0
  %454 = vmatpush2.msra.mxu0 0.0
  %455 = vmatprep.subr.mxu0 0.0
  %456 = vmatpush2.msra.mxu0 0.0
  %457 = vmatprep.subr.mxu0 0.0
  %458 = vmatpush2.msra.mxu0 0.0
  %459 = vmatprep.subr.mxu0 0.0
  %460 = vmatpush2.msra.mxu0 0.0
  %461 = vmatprep.subr.mxu0 0.0
  %462 = vmatpush2.msra.mxu0 0.0
  %463 = vmatprep.subr.mxu0 0.0
  %464 = vmatpush2.msra.mxu0 0.0
  %465 = vmatprep.subr.mxu0 0.0
  %466 = vmatpush2.msra.mxu0 0.0
  %467 = vmatprep.subr.mxu0 0.0
  %468 = vmatpush2.msra.mxu0 0.0
  %469 = vmatprep.subr.mxu0 0.0
  %470 = vmatpush2.msra.mxu0 0.0
  %471 = vmatprep.subr.mxu0 0.0
  %472 = vmatpush2.msra.mxu0 0.0
  %473 = vmatprep.subr.mxu0 0.0
  %474 = vmatpush2.msra.mxu0 0.0
  %475 = vmatprep.mubr.f32.mxu0 0.0
  %476 = vmatmul.mubr.f32.gmra.mxu0 %v408
  %v477 = vpop.f32.mrf.mxu0
  %v478 = vadd.f32 0.0, %v477
  %v479 = vpop.f32.mrf.mxu0
  %480 = vdwg.mxu0
  %v481 = vsub.f32 %v408, %v478
  %v482 = vmul.f32 %v481, %v481
  %483 = vmatprep.subr.mxu0 0.0
  %484 = vmatpush1.msra.mxu0 %v51
  %485 = vmatprep.subr.mxu0 0.0
  %486 = vmatpush1.msra.mxu0 %v50
  %487 = vmatprep.subr.mxu0 0.0
  %488 = vmatpush1.msra.mxu0 %v49
  %489 = vmatprep.subr.mxu0 0.0
  %490 = vmatpush1.msra.mxu0 %v48
  %491 = vmatprep.subr.mxu0 0.0
  %492 = vmatpush1.msra.mxu0 %v47
  %493 = vmatprep.subr.mxu0 0.0
  %494 = vmatpush1.msra.mxu0 %v46
  %495 = vmatprep.subr.mxu0 0.0
  %496 = vmatpush1.msra.mxu0 %v45
  %497 = vmatprep.subr.mxu0 0.0
  %498 = vmatpush1.msra.mxu0 %v44
  %499 = vmatprep.subr.mxu0 0.0
  %500 = vmatpush1.msra.mxu0 %v43
  %501 = vmatprep.subr.mxu0 0.0
  %502 = vmatpush1.msra.mxu0 %v42
  %503 = vmatprep.subr.mxu0 0.0
  %504 = vmatpush1.msra.mxu0 %v41
  %505 = vmatprep.subr.mxu0 0.0
  %506 = vmatpush1.msra.mxu0 %v40
  %507 = vmatprep.subr.mxu0 0.0
  %508 = vmatpush1.msra.mxu0 %v39
  %509 = vmatprep.subr.mxu0 0.0
  %510 = vmatpush1.msra.mxu0 %v38
  %511 = vmatprep.subr.mxu0 0.0
  %512 = vmatpush1.msra.mxu0 %v37
  %513 = vmatprep.subr.mxu0 0.0
  %514 = vmatpush1.msra.mxu0 %v36
  %515 = vmatprep.subr.mxu0 0.0
  %516 = vmatpush2.msra.mxu0 0.0
  %517 = vmatprep.subr.mxu0 0.0
  %518 = vmatpush2.msra.mxu0 0.0
  %519 = vmatprep.subr.mxu0 0.0
  %520 = vmatpush2.msra.mxu0 0.0
  %521 = vmatprep.subr.mxu0 0.0
  %522 = vmatpush2.msra.mxu0 0.0
  %523 = vmatprep.subr.mxu0 0.0
  %524 = vmatpush2.msra.mxu0 0.0
  %525 = vmatprep.subr.mxu0 0.0
  %526 = vmatpush2.msra.mxu0 0.0
  %527 = vmatprep.subr.mxu0 0.0
  %528 = vmatpush2.msra.mxu0 0.0
  %529 = vmatprep.subr.mxu0 0.0
  %530 = vmatpush2.msra.mxu0 0.0
  %531 = vmatprep.subr.mxu0 0.0
  %532 = vmatpush2.msra.mxu0 0.0
  %533 = vmatprep.subr.mxu0 0.0
  %534 = vmatpush2.msra.mxu0 0.0
  %535 = vmatprep.subr.mxu0 0.0
  %536 = vmatpush2.msra.mxu0 0.0
  %537 = vmatprep.subr.mxu0 0.0
  %538 = vmatpush2.msra.mxu0 0.0
  %539 = vmatprep.subr.mxu0 0.0
  %540 = vmatpush2.msra.mxu0 0.0
  %541 = vmatprep.subr.mxu0 0.0
  %542 = vmatpush2.msra.mxu0 0.0
  %543 = vmatprep.subr.mxu0 0.0
  %544 = vmatpush2.msra.mxu0 0.0
  %545 = vmatprep.subr.mxu0 0.0
  %546 = vmatpush2.msra.mxu0 0.0
  %547 = vmatprep.mubr.f32.mxu0 0.0
  %548 = vmatmul.mubr.f32.gmra.mxu0 %v482
  %v549 = vpop.f32.mrf.mxu0
  %v550 = vadd.f32 1e-05, %v549
  %v551 = vpop.f32.mrf.mxu0
  %552 = vdwg.mxu0
  %v553 = vrsqrt.pop %v550
  %v554 = vmul.f32 %v481, %v553
  %v556 = vlaneseq
  %v557 = vshrl.u32 %v556, 7
  %v558 = vsub.s32 0, %v557
  %v559 = vrot.slane %v409, %v558
  %v561 = vmul.f32 %v554, %v559
  %v563 = vlaneseq
  %v564 = vshrl.u32 %v563, 7
  %v565 = vsub.s32 0, %v564
  %v566 = vrot.slane %v410, %v565
  %v568 = vadd.f32 %v561, %v566
  %569 = vst [vmem:[%s10] sm:$0xff] %v568
  // Predicated region
  $region42: #{mlp_forward.1} parent=0 // pred_check
    _
  $region43: #{mlp_forward.1} parent=0 // pred_check_branch
    %571 = sbr.rel (0) target = $region45
  $region44: #{mlp_forward.1} parent=0 // pred_region
    _
  $region45: #{mlp_forward.1} parent=0 // pred_fallthru
    _
  // Predicated region
  $region46: #{mlp_forward.1} parent=0 // pred_check
    _
  $region47: #{mlp_forward.1} parent=0 // pred_check_branch
    %573 = sbr.rel (0) target = $region49
  $region48: #{mlp_forward.1} parent=0 // pred_region
    _
  $region49: #{mlp_forward.1} parent=0 // pred_fallthru
    _

</llo_original>
